<compile_context>
chip_gen: v5e
topology: v5e:2x2
jax: 0.10.0
libtpu: 0.0.40
codegen_flags: <defaults>
</compile_context>

<pallas_src>
import jax
import jax.numpy as jnp
from jax.experimental import pallas as pl
from jax.experimental.pallas import tpu as pltpu


def layernorm_kernel(x_ref, gamma_ref, beta_ref, o_ref, *, eps):
    x = x_ref[...].astype(jnp.float32)                           # (tile_rows, D)
    mean = jnp.mean(x, axis=-1, keepdims=True)                   # (tile_rows, 1)
    centered = x - mean
    var = jnp.mean(centered * centered, axis=-1, keepdims=True)  # unbiased=False
    inv_std = jax.lax.rsqrt(var + eps)
    out = centered * inv_std
    out = gamma_ref[...].astype(jnp.float32) * out + beta_ref[...].astype(jnp.float32)
    # Single full-block, lane-dense store (keeps v5e's single vst slot clean).
    o_ref[...] = out.astype(o_ref.dtype)


def _round_up(x, m):
    return (x + m - 1) // m * m


def _pick_tile_and_vmem(rows, d_model, itemsize):
    """Pick (tile_rows, vmem_limit_bytes).

    tile_rows is sized by bytes (~2 MiB input blocks), clamped so the full
    working set — double-buffered in/out blocks plus ~2 block-sized f32
    temporaries from the in-kernel upcast — stays well inside physical VMEM,
    and so the grid has enough steps to shard across v7x's two TensorCores.
    """
    rows8 = _round_up(max(rows, 1), 8)

    # Per-row VMEM cost: in + out double-buffered (4 copies at input itemsize)
    # plus ~2 block-sized f32 temporaries (upcast / centered).
    bytes_per_row = d_model * (4 * itemsize + 2 * 4)

    # Physical VMEM per TensorCore: 128 MiB (v5e/v6e), 64 MiB (v7x).
    try:
        phys = int(pltpu.get_tpu_info().vmem_capacity_bytes)
    except Exception:
        phys = 64 * 1024 * 1024  # conservative fallback = v7x per-TC VMEM

    # Rows allowed by VMEM (keep working set <= ~60% of physical).
    vmem_cap_rows = max(8, (int(phys * 0.6) // max(1, bytes_per_row)) // 8 * 8)

    # Byte target: ~2 MiB per input block (>=85% of HBM roofline regime).
    target_block_bytes = 2 * 1024 * 1024
    byte_rows = max(8, _round_up(pl.cdiv(target_block_bytes, d_model * itemsize), 8))

    # Megacore: guarantee >= ~8 grid steps (>= 4 per TC on v7x) when rows allow,
    # so dimension_semantics=("parallel",) has something to shard and each TC
    # still gets a pipelined (double-buffered) stream of blocks.
    min_steps = 8
    steps_rows = max(8, _round_up(pl.cdiv(rows8, min_steps), 8))

    tile_rows = min(byte_rows, vmem_cap_rows, steps_rows, rows8)
    tile_rows = max(8, (tile_rows // 8) * 8)

    # Footprint-based scoped-VMEM request (+20% headroom), not a blanket 96 MiB.
    block_bytes = tile_rows * d_model * itemsize
    footprint = (
        4 * block_bytes                    # in + out, double-buffered
        + 2 * tile_rows * d_model * 4      # f32 upcast temporaries
        + 2 * d_model * 4                  # resident gamma/beta
    )
    vmem_limit = int(footprint * 1.2) + (1 << 20)
    vmem_limit = min(max(vmem_limit, 4 * 1024 * 1024), int(phys))
    return tile_rows, vmem_limit


def layer_norm(x, gamma, beta, eps=1e-12):
    orig_shape = x.shape
    d_model = orig_shape[-1]
    x2 = x.reshape(-1, d_model)
    rows = x2.shape[0]
    itemsize = jnp.dtype(x.dtype).itemsize

    tile_rows, vmem_limit = _pick_tile_and_vmem(rows, d_model, itemsize)

    gamma2 = gamma.reshape(1, d_model)
    beta2 = beta.reshape(1, d_model)

    # Non-dividing grid: the last block is partial; OOB rows are read as
    # arbitrary data and their outputs are dropped by the pipeline. No wrapper
    # pad/slice -> no extra HBM pass.
    grid = (pl.cdiv(rows, tile_rows),)

    # NOTE: for d_model < 128 the last-dim block is not lane-dense; plain XLA
    # may match the kernel there. Production d_model that is a multiple of 128
    # gets unmasked full-lane stores.
    out = pl.pallas_call(
        lambda xr, gr, br, orf: layernorm_kernel(xr, gr, br, orf, eps=eps),
        out_shape=jax.ShapeDtypeStruct((rows, d_model), x.dtype),
        grid_spec=pltpu.PrefetchScalarGridSpec(
            num_scalar_prefetch=0,
            grid=grid,
            in_specs=[
                pl.BlockSpec((tile_rows, d_model), lambda i: (i, 0)),
                # Constant index_map -> gamma/beta stay resident in VMEM.
                pl.BlockSpec((1, d_model), lambda i: (0, 0)),
                pl.BlockSpec((1, d_model), lambda i: (0, 0)),
            ],
            out_specs=pl.BlockSpec((tile_rows, d_model), lambda i: (i, 0)),
        ),
        compiler_params=pltpu.CompilerParams(
            dimension_semantics=("parallel",),   # shard row grid across TCs (v7x megacore)
            vmem_limit_bytes=vmem_limit,
        ),
    )(x2, gamma2, beta2)

    return out.reshape(orig_shape)


def _reference(x, gamma, beta, eps):
    mean = jnp.mean(x, axis=-1, keepdims=True)
    var = jnp.mean((x - mean) ** 2, axis=-1, keepdims=True)
    return gamma * ((x - mean) / jnp.sqrt(var + eps)) + beta


if __name__ == "__main__":
    key = jax.random.PRNGKey(0)
    EPS = 1e-12

    # Lane-dense d_model (multiple of 128) — the intended production regime.
    B, S, D = 2, 8, 256
    x = jax.random.normal(key, (B, S, D), dtype=jnp.float32)
    gamma = jnp.ones((D,), dtype=jnp.float32)   # matches nn.Parameter(torch.ones(d_model))
    beta = jnp.zeros((D,), dtype=jnp.float32)   # matches nn.Parameter(torch.zeros(d_model))

    out = layer_norm(x, gamma, beta, eps=EPS)
    jax.block_until_ready(out)
    ref = _reference(x, gamma, beta, EPS)
    assert jnp.allclose(out, ref, atol=1e-5, rtol=1e-5), "mismatch vs reference"

    # Awkward row count (batch*seq not a multiple of tile_rows) — exercises the
    # partial final block (no wrapper padding / slicing anymore).
    key2 = jax.random.PRNGKey(1)
    x2 = jax.random.normal(key2, (3, 5, D), dtype=jnp.float32)
    out2 = layer_norm(x2, gamma, beta, eps=EPS)
    jax.block_until_ready(out2)
    ref2 = _reference(x2, gamma, beta, EPS)
    assert jnp.allclose(out2, ref2, atol=1e-5, rtol=1e-5), "mismatch vs reference (partial block)"

    print("KERNEL_OK")
</pallas_src>

<mosaic_0001>
module attributes {stable_mosaic.version = 11 : i64} {
  func.func @_lambda_(%arg0: i32, %arg1: memref<8x256xf32, #tpu.memory_space<vmem>>, %arg2: memref<1x256xf32, #tpu.memory_space<vmem>>, %arg3: memref<1x256xf32, #tpu.memory_space<vmem>>, %arg4: memref<8x256xf32, #tpu.memory_space<vmem>>) attributes {dimension_semantics = [#tpu.dimension_semantics<parallel>], iteration_bounds = array<i64: 2>, scalar_prefetch = 0 : i64, scratch_operands = 0 : i64, tpu.core_type = #tpu.core_type<tc>, window_params = [{transform_indices = @transform_0, window_bounds = array<i64: 8, 256>}, {pipeline_mode = #tpu.pipeline_mode<synchronous>, transform_indices = @transform_1, window_bounds = array<i64: 1, 256>}, {pipeline_mode = #tpu.pipeline_mode<synchronous>, transform_indices = @transform_2, window_bounds = array<i64: 1, 256>}, {transform_indices = @transform_3, window_bounds = array<i64: 8, 256>}]} {
    %c0 = arith.constant 0 : index
    %c0_0 = arith.constant 0 : index
    %0 = vector.load %arg1[%c0, %c0_0] : memref<8x256xf32, #tpu.memory_space<vmem>>, vector<8x256xf32>
    %cst = arith.constant dense<0.000000e+00> : vector<8xf32>
    %1 = vector.multi_reduction <add>, %0, %cst [1] : vector<8x256xf32> to vector<8xf32>
    %2 = vector.shape_cast %1 : vector<8xf32> to vector<8x1xf32>
    %cst_1 = arith.constant 2.560000e+02 : f32
    %3 = vector.broadcast %cst_1 : f32 to vector<8x1xf32>
    %4 = arith.divf %2, %3 : vector<8x1xf32>
    %5 = vector.broadcast %4 : vector<8x1xf32> to vector<8x256xf32>
    %6 = arith.subf %0, %5 : vector<8x256xf32>
    %7 = arith.mulf %6, %6 : vector<8x256xf32>
    %cst_2 = arith.constant dense<0.000000e+00> : vector<8xf32>
    %8 = vector.multi_reduction <add>, %7, %cst_2 [1] : vector<8x256xf32> to vector<8xf32>
    %9 = vector.shape_cast %8 : vector<8xf32> to vector<8x1xf32>
    %cst_3 = arith.constant 2.560000e+02 : f32
    %10 = vector.broadcast %cst_3 : f32 to vector<8x1xf32>
    %11 = arith.divf %9, %10 : vector<8x1xf32>
    %cst_4 = arith.constant 9.99999996E-13 : f32
    %12 = vector.broadcast %cst_4 : f32 to vector<8x1xf32>
    %13 = arith.addf %11, %12 : vector<8x1xf32>
    %14 = math.rsqrt %13 : vector<8x1xf32>
    %15 = vector.broadcast %14 : vector<8x1xf32> to vector<8x256xf32>
    %16 = arith.mulf %6, %15 : vector<8x256xf32>
    %c0_5 = arith.constant 0 : index
    %c0_6 = arith.constant 0 : index
    %17 = vector.load %arg2[%c0_5, %c0_6] : memref<1x256xf32, #tpu.memory_space<vmem>>, vector<1x256xf32>
    %18 = vector.broadcast %17 : vector<1x256xf32> to vector<8x256xf32>
    %19 = arith.mulf %18, %16 : vector<8x256xf32>
    %c0_7 = arith.constant 0 : index
    %c0_8 = arith.constant 0 : index
    %20 = vector.load %arg3[%c0_7, %c0_8] : memref<1x256xf32, #tpu.memory_space<vmem>>, vector<1x256xf32>
    %21 = vector.broadcast %20 : vector<1x256xf32> to vector<8x256xf32>
    %22 = arith.addf %19, %21 : vector<8x256xf32>
    %c0_9 = arith.constant 0 : index
    %c0_10 = arith.constant 0 : index
    %23 = vector.load %arg4[%c0_9, %c0_10] : memref<8x256xf32, #tpu.memory_space<vmem>>, vector<8x256xf32>
    tpu.vector_store %arg4[%c0_9, %c0_10], %22 {strides = array<i32>} : memref<8x256xf32, #tpu.memory_space<vmem>>, vector<8x256xf32>,
    return
  }
  func.func @transform_0(%arg0: i32) -> (i32, i32) {
    %c0_i32 = arith.constant 0 : i32
    %c0_i32_0 = arith.constant 0 : i32
    return %arg0, %c0_i32 : i32, i32
  }
  func.func @transform_1(%arg0: i32) -> (i32, i32) {
    %c0_i32 = arith.constant 0 : i32
    %c0_i32_0 = arith.constant 0 : i32
    %c0_i32_1 = arith.constant 0 : i32
    return %c0_i32, %c0_i32_0 : i32, i32
  }
  func.func @transform_2(%arg0: i32) -> (i32, i32) {
    %c0_i32 = arith.constant 0 : i32
    %c0_i32_0 = arith.constant 0 : i32
    %c0_i32_1 = arith.constant 0 : i32
    return %c0_i32, %c0_i32_0 : i32, i32
  }
  func.func @transform_3(%arg0: i32) -> (i32, i32) {
    %c0_i32 = arith.constant 0 : i32
    %c0_i32_0 = arith.constant 0 : i32
    return %arg0, %c0_i32 : i32, i32
  }
}

</mosaic_0001>

<llo_original>
// kernel: tpu_custom_call.1
$region0: #{tpu_custom_call.1}
  #allocation0 [shape = 'u32[]', space=smem, size = 0x4, offset = 0x4, fixed_abs, tag = 'smem constant byte address 0x4 - core index']
  #allocation1 [shape = 'u32[72,128]{1,0:T(1,128)}', space=vmem, size = 0x9000, scoped, tag = 'internal scratch']
  %s0 = inlined_call_operand.hbm [shape: f32[16,256], index: 0, kind: input, shape index: {}]
  %s1 = inlined_call_operand.hbm [shape: f32[1,256], index: 1, kind: input, shape index: {}]
  %s2 = inlined_call_operand.hbm [shape: f32[1,256], index: 2, kind: input, shape index: {}]
  %s3 = inlined_call_operand.hbm [shape: f32[16,256], index: 3, kind: output, shape index: {}]
  %s4 = sld [smem:[#allocation0]]
  $region57: #{tpu_custom_call.1} parent=0
    _
  %s6 = ssub.s32 1, %s4
  %s7 = scalar_select 0, %s6, %s4
  $region1: #{tpu_custom_call.1} parent=0
    #allocation2 [shape = 'u8[16384]{0}', space=vmem, size = 0x4000, scoped, tag = 'input window, operand 0']
    #allocation3 [shape = 's32[2]{0}', space=sflag, size = 0x8, scoped, tag = 'scoped memory for tpu_custom_call.1']
    #allocation4 [shape = 's32[2]{0}', space=sflag, size = 0x8, scoped, tag = 'scoped memory for tpu_custom_call.1']
    #allocation5 [shape = 'u8[1024]{0}', space=vmem, size = 0x400, scoped, tag = 'input window, operand 1, single buffered']
    #allocation6 [shape = 's32[1]{0}', space=sflag, size = 0x4, scoped, tag = 'scoped memory for tpu_custom_call.1']
    #allocation7 [shape = 'u8[1024]{0}', space=vmem, size = 0x400, scoped, tag = 'input window, operand 2, single buffered']
    #allocation8 [shape = 'u8[16384]{0}', space=vmem, size = 0x4000, scoped, tag = 'output window, operand 0']
    %8 = vsyncpa [#allocation3], 0
    %s9 = scalar_lea.sflag [#allocation3], 1
    %10 = vsyncpa %s9, 0
    %11 = vsyncpa [#allocation6], 0
    %12 = vsyncpa [#allocation4], 0
    %s13 = scalar_lea.sflag [#allocation4], 1
    %14 = vsyncpa %s13, 0
    loop: start=0, step=1, limit=4
    $region2: #{tpu_custom_call.1} parent=1 // loop_pre_header
      _
    $region3: #{tpu_custom_call.1} parent=1 // loop_header
      %s16 = sphi 0, %s20
      %p17 = scmp.ge.s32.totalorder %s16, 4
      %s26 = sphi 0, %s28
      %s29 = sphi 0, %s26
      %s30 = sphi 0, %s29
      %s46 = sphi 0, %s30
      %s50 = sphi 0, %s50
      %s52 = sphi 0, %s50
      %s53 = sphi 0, %s52
      %s67 = sphi 0, %s53
      %s71 = sphi 0, %s71
      %s73 = sphi 0, %s71
      %s74 = sphi 0, %s73
      %s88 = sphi 0, %s74
      %s94 = sphi 0, %s96
      %s97 = sphi 0, %s94
      %s98 = sphi 0, %s97
      %s114 = sphi 0, %s98
    $region4: #{tpu_custom_call.1} parent=1 // loop_header_branch
      %19 = sbr.rel (%p17) target = $region8
    $region5: #{tpu_custom_call.1} parent=1 // loop_body
      %s21 = ssub.s32 %s16, 1
      %s22 = ssub.s32 %s16, 2
      %s23 = sadd.s32 %s16, 1
      %s24 = ssub.s32 %s16, %s23
      %p25 = scmp.eq.s32.totalorder %s24, 0
      %s27 = sadd.s32 %s26, 1
      %s28 = scalar_select %p25, %s26, %s27
      %p31 = pneg %p25
      %p32 = scmp.eq.s32.totalorder %s16, 1
      %p33 = por %p31, %p32
      %p34 = scmp.ne.s32.totalorder %s26, %s29
      %p35 = scmp.eq.s32.totalorder %s16, 0
      %p36 = por %p34, %p35
      %p37 = scmp.ne.s32.totalorder %s26, %s29
      %p38 = scmp.eq.s32.totalorder %s21, 1
      %p39 = por %p37, %p38
      %p40 = scmp.ne.s32.totalorder %s29, %s30
      %p41 = scmp.eq.s32.totalorder %s21, 0
      %p42 = por %p40, %p41
      %p43 = scmp.ne.s32.totalorder %s29, %s30
      %p44 = scmp.eq.s32.totalorder %s22, 1
      %p45 = por %p43, %p44
      %p47 = scmp.ne.s32.totalorder %s30, %s46
      %p48 = scmp.eq.s32.totalorder %s22, 0
      %p49 = por %p47, %p48
      %s51 = sadd.s32 %s50, 1
      %p54 = scmp.eq.s32.totalorder %s16, 1
      %p55 = scmp.ne.s32.totalorder %s50, %s52
      %p56 = scmp.eq.s32.totalorder %s16, 0
      %p57 = por %p55, %p56
      %p58 = scmp.ne.s32.totalorder %s50, %s52
      %p59 = scmp.eq.s32.totalorder %s21, 1
      %p60 = por %p58, %p59
      %p61 = scmp.ne.s32.totalorder %s52, %s53
      %p62 = scmp.eq.s32.totalorder %s21, 0
      %p63 = por %p61, %p62
      %p64 = scmp.ne.s32.totalorder %s52, %s53
      %p65 = scmp.eq.s32.totalorder %s22, 1
      %p66 = por %p64, %p65
      %p68 = scmp.ne.s32.totalorder %s53, %s67
      %p69 = scmp.eq.s32.totalorder %s22, 0
      %p70 = por %p68, %p69
      %s72 = sadd.s32 %s71, 1
      %p75 = scmp.eq.s32.totalorder %s16, 1
      %p76 = scmp.ne.s32.totalorder %s71, %s73
      %p77 = scmp.eq.s32.totalorder %s16, 0
      %p78 = por %p76, %p77
      %p79 = scmp.ne.s32.totalorder %s71, %s73
      %p80 = scmp.eq.s32.totalorder %s21, 1
      %p81 = por %p79, %p80
      %p82 = scmp.ne.s32.totalorder %s73, %s74
      %p83 = scmp.eq.s32.totalorder %s21, 0
      %p84 = por %p82, %p83
      %p85 = scmp.ne.s32.totalorder %s73, %s74
      %p86 = scmp.eq.s32.totalorder %s22, 1
      %p87 = por %p85, %p86
      %p89 = scmp.ne.s32.totalorder %s74, %s88
      %p90 = scmp.eq.s32.totalorder %s22, 0
      %p91 = por %p89, %p90
      %s92 = ssub.s32 %s16, %s23
      %p93 = scmp.eq.s32.totalorder %s92, 0
      %s95 = sadd.s32 %s94, 1
      %s96 = scalar_select %p93, %s94, %s95
      %p99 = pneg %p93
      %p100 = scmp.eq.s32.totalorder %s16, 1
      %p101 = por %p99, %p100
      %p102 = scmp.ne.s32.totalorder %s94, %s97
      %p103 = scmp.eq.s32.totalorder %s16, 0
      %p104 = por %p102, %p103
      %p105 = scmp.ne.s32.totalorder %s94, %s97
      %p106 = scmp.eq.s32.totalorder %s21, 1
      %p107 = por %p105, %p106
      %p108 = scmp.ne.s32.totalorder %s97, %s98
      %p109 = scmp.eq.s32.totalorder %s21, 0
      %p110 = por %p108, %p109
      %p111 = scmp.ne.s32.totalorder %s97, %s98
      %p112 = scmp.eq.s32.totalorder %s22, 1
      %p113 = por %p111, %p112
      %p115 = scmp.ne.s32.totalorder %s98, %s114
      %p116 = scmp.eq.s32.totalorder %s22, 0
      %p117 = por %p115, %p116
      %p118 = scmp.le.s32.totalorder 1, %s16
      %p119 = scmp.lt.s32.totalorder %s16, 3
      %p120 = pnand %p118, %p119
      %p121 = pneg %p120
      // Predicated region
      $region9: #{tpu_custom_call.1} parent=5 // pred_check
        _
      $region10: #{tpu_custom_call.1} parent=5 // pred_check_branch
        %123 = sbr.rel (%p120) target = $region12
      $region11: #{tpu_custom_call.1} parent=5 // pred_region
        %s124 = ssub.s32 %s16, 1
        // Predicated region
        $region13: #{tpu_custom_call.1} parent=11 // pred_check
          %p125 = pneg %p63
        $region14: #{tpu_custom_call.1} parent=11 // pred_check_branch
          %127 = sbr.rel (%p125) target = $region16
        $region15: #{tpu_custom_call.1} parent=11 // pred_region
          %129 = vsyncadd [#allocation6], 0
          %s131 = sshll.u32 %s1, 4
          %s132 = int_to_ptr.hbm [resolvable:$true] %s131
          %s133 = sshll.u32 [#allocation5], 4
          %s134 = int_to_ptr.vmem [resolvable:$true] %s133
          %136 = dma.hbm_to_vmem [thread:$0]  %s132, 32, %s134, [#allocation6]
        $region16: #{tpu_custom_call.1} parent=11 // pred_fallthru
          _
        // Predicated region
        $region17: #{tpu_custom_call.1} parent=11 // pred_check
          %p137 = pneg %p84
        $region18: #{tpu_custom_call.1} parent=11 // pred_check_branch
          %139 = sbr.rel (%p137) target = $region20
        $region19: #{tpu_custom_call.1} parent=11 // pred_region
          %141 = vsyncadd [#allocation6], 0
          %s143 = sshll.u32 %s2, 4
          %s144 = int_to_ptr.hbm [resolvable:$true] %s143
          %s145 = sshll.u32 [#allocation7], 4
          %s146 = int_to_ptr.vmem [resolvable:$true] %s145
          %148 = dma.hbm_to_vmem [thread:$0]  %s144, 32, %s146, [#allocation6]
        $region20: #{tpu_custom_call.1} parent=11 // pred_fallthru
          _
      $region12: #{tpu_custom_call.1} parent=5 // pred_fallthru
        _
      %p149 = scmp.lt.s32.totalorder %s16, 2
      // Predicated region
      $region21: #{tpu_custom_call.1} parent=5 // pred_check
        %p150 = pneg %p149
      $region22: #{tpu_custom_call.1} parent=5 // pred_check_branch
        %152 = sbr.rel (%p150) target = $region24
      $region23: #{tpu_custom_call.1} parent=5 // pred_region
        // Predicated region
        $region25: #{tpu_custom_call.1} parent=23 // pred_check
          %p153 = pneg %p36
        $region26: #{tpu_custom_call.1} parent=23 // pred_check_branch
          %155 = sbr.rel (%p153) target = $region28
        $region27: #{tpu_custom_call.1} parent=23 // pred_region
          %s156 = sand.u32 %s26, 1
          %s157 = scalar_lea.sflag [#allocation3], %s156
          %s158 = sand.u32 %s26, 1
          %s159 = smul.addr %s158, 16
          %s160 = scalar_lea.vmem [#allocation2], %s159
          %162 = vsyncadd %s157, 0
          %s163 = smul.addr %s16, 2
          %s164 = smul.addr %s163, 8
          %s165 = scalar_lea.hbm %s0, %s164
          %s167 = sshll.u32 %s165, 4
          %s168 = int_to_ptr.hbm [resolvable:$true] %s167
          %s169 = sshll.u32 %s160, 4
          %s170 = int_to_ptr.vmem [resolvable:$true] %s169
          %172 = dma.hbm_to_vmem [thread:$0]  %s168, 256, %s170, %s157
        $region28: #{tpu_custom_call.1} parent=23 // pred_fallthru
          _
      $region24: #{tpu_custom_call.1} parent=5 // pred_fallthru
        _
      %p173 = scmp.le.s32.totalorder 1, %s16
      %p174 = scmp.lt.s32.totalorder %s16, 3
      %p175 = pnand %p173, %p174
      %p176 = pneg %p175
      // Predicated region
      $region29: #{tpu_custom_call.1} parent=5 // pred_check
        _
      $region30: #{tpu_custom_call.1} parent=5 // pred_check_branch
        %178 = sbr.rel (%p175) target = $region32
      $region31: #{tpu_custom_call.1} parent=5 // pred_region
        %s179 = ssub.s32 %s16, 1
        %s180 = sand.u32 %s29, 1
        %s181 = scalar_lea.sflag [#allocation3], %s180
        %s182 = sand.u32 %s29, 1
        %s183 = smul.addr %s182, 16
        %s184 = scalar_lea.vmem [#allocation2], %s183
        // Predicated region
        $region33: #{tpu_custom_call.1} parent=31 // pred_check
          %p185 = pneg %p42
        $region34: #{tpu_custom_call.1} parent=31 // pred_check_branch
          %187 = sbr.rel (%p185) target = $region36
        $region35: #{tpu_custom_call.1} parent=31 // pred_region
          %189 = dma.done %s181, 256
        $region36: #{tpu_custom_call.1} parent=31 // pred_fallthru
          _
        // Predicated region
        $region37: #{tpu_custom_call.1} parent=31 // pred_check
          %p190 = pneg %p63
        $region38: #{tpu_custom_call.1} parent=31 // pred_check_branch
          %192 = sbr.rel (%p190) target = $region40
        $region39: #{tpu_custom_call.1} parent=31 // pred_region
          %194 = dma.done [#allocation6], 32
        $region40: #{tpu_custom_call.1} parent=31 // pred_fallthru
          _
        // Predicated region
        $region41: #{tpu_custom_call.1} parent=31 // pred_check
          %p195 = pneg %p84
        $region42: #{tpu_custom_call.1} parent=31 // pred_check_branch
          %197 = sbr.rel (%p195) target = $region44
        $region43: #{tpu_custom_call.1} parent=31 // pred_region
          %199 = dma.done [#allocation6], 32
        $region44: #{tpu_custom_call.1} parent=31 // pred_fallthru
          _
        %s200 = sand.u32 %s29, 1
        %s201 = scalar_lea.sflag [#allocation3], %s200
        %s202 = sand.u32 %s29, 1
        %s203 = smul.addr %s202, 16
        %s204 = scalar_lea.vmem [#allocation2], %s203
        %p205 = pneg %p42
        %p206 = pneg %p39
        %p207 = pneg %p63
        %p208 = pneg %p60
        %p209 = pneg %p84
        %p210 = pneg %p81
        %p211 = pneg %p110
        %p212 = pneg %p107
        %s213 = sand.u32 %s97, 1
        %s214 = scalar_lea.sflag [#allocation4], %s213
        %s215 = sand.u32 %s97, 1
        %s216 = smul.addr %s215, 16
        %s217 = scalar_lea.vmem [#allocation8], %s216
        %v218 = vld [vmem:[%s184] sm:$0xff]
        %v219 = vld [vmem:[%s184 + $0x8] sm:$0xff]
        %v220 = vadd.f32 %v218, %v219
        %221 = vadd.xlane.f32.xlu0 %v220
        %v222 = vpop.xlane.xlu0 %221
        %v223 = vrcp.pop 256.0
        %v224 = vmul.f32 256.0, %v223
        %v225 = vsub.f32 1.0, %v224
        %v226 = vmul.f32 %v223, %v225
        %v227 = vadd.f32 %v223, %v226
        %vm228 = vweird.f32 %v223
        %v229 = vsel %vm228, %v223, %v227
        %v230 = vmul.f32 %v222, %v229
        %v231 = vsub.f32 %v218, %v230
        %v232 = vsub.f32 %v219, %v230
        %v233 = vmul.f32 %v231, %v231
        %v234 = vmul.f32 %v232, %v232
        %v235 = vadd.f32 %v233, %v234
        %236 = vadd.xlane.f32.xlu0 %v235
        %v237 = vpop.xlane.xlu0 %236
        %v238 = vmul.f32 %v237, %v229
        %v239 = vadd.f32 %v238, 1e-12
        %v240 = vrsqrt.pop %v239
        %v241 = vmul.f32 %v240, %v239
        %v242 = vmul.f32 %v241, %v240
        %v243 = vmul.f32 0.5, %v242
        %v244 = vsub.f32 1.5, %v243
        %v245 = vmul.f32 %v240, %v244
        %vm246 = vweird.f32 %v239
        %vm247 = vweird.f32 %v240
        %vm248 = vmor %vm246, %vm247
        %v249 = vsel %vm248, %v240, %v245
        %v250 = vmul.f32 %v231, %v249
        %v251 = vmul.f32 %v232, %v249
        %v252 = vld [vmem:[#allocation5] sm:$0x3]
        %v254 = vperm.slane %v252, 0
        %v255 = vperm.slane %v252, 1
        %v258 = vmul.f32 %v254, %v250
        %v259 = vmul.f32 %v255, %v251
        %v260 = vld [vmem:[#allocation7] sm:$0x3]
        %v262 = vperm.slane %v260, 0
        %v263 = vperm.slane %v260, 1
        %v266 = vadd.f32 %v258, %v262
        %v267 = vadd.f32 %v259, %v263
        %268 = vst [vmem:[%s217] sm:$0xff] %v266
        %269 = vst [vmem:[%s217 + $0x8] sm:$0xff] %v267
        %s270 = sand.u32 %s97, 1
        %s271 = scalar_lea.sflag [#allocation4], %s270
        %s272 = sand.u32 %s97, 1
        %s273 = smul.addr %s272, 16
        %s274 = scalar_lea.vmem [#allocation8], %s273
        // Predicated region
        $region45: #{tpu_custom_call.1} parent=31 // pred_check
          %p275 = pneg %p107
        $region46: #{tpu_custom_call.1} parent=31 // pred_check_branch
          %277 = sbr.rel (%p275) target = $region48
        $region47: #{tpu_custom_call.1} parent=31 // pred_region
          %279 = vsyncadd %s271, 0
          %s280 = smul.addr %s21, 2
          %s281 = smul.addr %s280, 8
          %s282 = scalar_lea.hbm %s3, %s281
          %s284 = sshll.u32 %s274, 4
          %s285 = int_to_ptr.vmem [resolvable:$true] %s284
          %s286 = sshll.u32 %s282, 4
          %s287 = int_to_ptr.hbm [resolvable:$true] %s286
          %289 = dma.vmem_to_hbm [thread:$0]  %s285, 256, %s287, %s271
        $region48: #{tpu_custom_call.1} parent=31 // pred_fallthru
          _
      $region32: #{tpu_custom_call.1} parent=5 // pred_fallthru
        _
      %p290 = scmp.le.s32.totalorder 2, %s16
      // Predicated region
      $region49: #{tpu_custom_call.1} parent=5 // pred_check
        %p291 = pneg %p290
      $region50: #{tpu_custom_call.1} parent=5 // pred_check_branch
        %293 = sbr.rel (%p291) target = $region52
      $region51: #{tpu_custom_call.1} parent=5 // pred_region
        %s294 = ssub.s32 %s16, 2
        // Predicated region
        $region53: #{tpu_custom_call.1} parent=51 // pred_check
          %p295 = pneg %p113
        $region54: #{tpu_custom_call.1} parent=51 // pred_check_branch
          %297 = sbr.rel (%p295) target = $region56
        $region55: #{tpu_custom_call.1} parent=51 // pred_region
          %s298 = sand.u32 %s98, 1
          %s299 = scalar_lea.sflag [#allocation4], %s298
          %s300 = sand.u32 %s98, 1
          %s301 = smul.addr %s300, 16
          %s302 = scalar_lea.vmem [#allocation8], %s301
          %304 = dma.done %s299, 256
        $region56: #{tpu_custom_call.1} parent=51 // pred_fallthru
          _
      $region52: #{tpu_custom_call.1} parent=5 // pred_fallthru
        _
    $region6: #{tpu_custom_call.1} parent=1 // loop_footer
      %s20 = sadd.s32 1, %s16
    $region7: #{tpu_custom_call.1} parent=1 // loop_footer_branch
      %15 = sbr.rel target = $region3
    $region8: #{tpu_custom_call.1} parent=1 // loop_exit
      _
    %305 = vsyncpa [#allocation3], 1
    %s306 = scalar_lea.sflag [#allocation3], 1
    %307 = vsyncpa %s306, 1
    %308 = vsyncpa [#allocation6], 1
    %309 = vsyncpa [#allocation4], 1
    %s310 = scalar_lea.sflag [#allocation4], 1
    %311 = vsyncpa %s310, 1

</llo_original>
